<compile_context>
chip_gen: v7x
topology: tpu7x:2x2x1
jax: 0.10.0
libtpu: 0.0.40
codegen_flags: <defaults>
</compile_context>

<pallas_src>
import jax
import jax.numpy as jnp
from jax.experimental import pallas as pl
from jax.experimental.pallas import tpu as pltpu

_SUBLANE = 8


def _round_up(x, m):
    return ((x + m - 1) // m) * m


def _decoder_kernel(z_ref, w1_ref, b1_ref, w2_ref, b2_ref, w3_ref, b3_ref, o_ref):
    """Fused MLP forward: Linear -> LeakyReLU -> Linear -> LeakyReLU -> Linear.

    MXU matmuls accumulate in f32; bias-add / LeakyReLU epilogue runs in f32.
    Activations are cast to the weight dtype (VMEM-local, cheap) before each matmul so
    bf16 operands hit the fast MXU path on v6e/v7x.
    """
    slope = jnp.float32(0.2)

    # Layer 0: Linear(dim_z, n0) + LeakyReLU(0.2)
    x = z_ref[...].astype(w1_ref.dtype)
    h = jnp.dot(x, w1_ref[...], preferred_element_type=jnp.float32)
    h = h + b1_ref[...]
    h = jnp.where(h > 0, h, slope * h)

    # Layer 1: Linear(n0, n1) + LeakyReLU(0.2)
    h = jnp.dot(h.astype(w2_ref.dtype), w2_ref[...],
                preferred_element_type=jnp.float32)
    h = h + b2_ref[...]
    h = jnp.where(h > 0, h, slope * h)

    # mu_net: Linear(n1, dim_x), no final activation (final_activation=None)
    o = jnp.dot(h.astype(w3_ref.dtype), w3_ref[...],
                preferred_element_type=jnp.float32)
    o = o + b3_ref[...]
    o_ref[...] = o.astype(o_ref.dtype)


def decoder_forward(z, params, *, tile_b=1024, compute_dtype=None, out_dtype=None):
    """Fused Decoder forward with a single Pallas kernel.

    z:       (B, dim_z); pass it already in bf16 if you want bf16 input traffic
             (the wrapper never re-writes z to HBM).
    params:  dict w1,b1,w2,b2,w3,b3; weights (in, out), biases (1, out).
    tile_b:  batch tile (clamped to the batch; capped at ~B/2 so v7x gets 2 grid steps).
    compute_dtype: MXU operand dtype for the weights (e.g. jnp.bfloat16 on v6e/v7x);
             accumulation is always f32. None -> keep the stored weight dtype.
    out_dtype: output dtype (defaults to z.dtype).
    """
    B, dim_z = z.shape
    n0 = params["w1"].shape[1]
    n1 = params["w2"].shape[1]
    dim_x = params["w3"].shape[1]

    if out_dtype is None:
        out_dtype = z.dtype
    w_dtype = params["w1"].dtype if compute_dtype is None else compute_dtype

    # Weights/biases are tiny; casting them here is negligible. z is NOT touched.
    w1 = params["w1"].astype(w_dtype)
    w2 = params["w2"].astype(w_dtype)
    w3 = params["w3"].astype(w_dtype)
    b1 = params["b1"].reshape(1, n0).astype(jnp.float32)
    b2 = params["b2"].reshape(1, n1).astype(jnp.float32)
    b3 = params["b3"].reshape(1, dim_x).astype(jnp.float32)

    # Batch tiling: multiple of the 8-row sublane, no rounding of B itself.
    B_ceil = _round_up(B, _SUBLANE)
    tile_b = max(_SUBLANE, min(_round_up(tile_b, _SUBLANE), B_ceil))
    if B_ceil >= 2 * _SUBLANE:
        # Keep >= 2 grid steps when the batch allows it (v7x megacore: 2 TCs).
        tile_b = min(tile_b, _round_up((B_ceil + 1) // 2, _SUBLANE))
    grid = (pl.cdiv(B, tile_b),)

    # z / output blocks use the true feature widths (equal to the full array dims, so
    # the (8,128) block constraint is satisfied without any lane padding in HBM).
    # Weights/biases are grid-invariant -> fetched once, VMEM-resident across steps.
    in_specs = [
        pl.BlockSpec((tile_b, dim_z), lambda i: (i, 0)),  # z tile
        pl.BlockSpec((dim_z, n0), lambda i: (0, 0)),      # w1
        pl.BlockSpec((1, n0), lambda i: (0, 0)),          # b1
        pl.BlockSpec((n0, n1), lambda i: (0, 0)),         # w2
        pl.BlockSpec((1, n1), lambda i: (0, 0)),          # b2
        pl.BlockSpec((n1, dim_x), lambda i: (0, 0)),      # w3
        pl.BlockSpec((1, dim_x), lambda i: (0, 0)),       # b3
    ]
    out_specs = pl.BlockSpec((tile_b, dim_x), lambda i: (i, 0))

    return pl.pallas_call(
        _decoder_kernel,
        out_shape=jax.ShapeDtypeStruct((B, dim_x), out_dtype),
        grid_spec=pltpu.PrefetchScalarGridSpec(
            num_scalar_prefetch=0,
            grid=grid,
            in_specs=in_specs,
            out_specs=out_specs,
        ),
        compiler_params=pltpu.CompilerParams(
            dimension_semantics=("parallel",),  # batch axis shards across v7x's 2 TCs
        ),
    )(z, w1, b1, w2, b2, w3, b3)


def init_decoder_params(key, dim_z, decoder_node_list, dim_x):
    """PyTorch nn.Linear-style init: U(-1/sqrt(fan_in), 1/sqrt(fan_in)) for W and b.
    Weights stored as (in, out)."""
    sizes = [dim_z] + list(decoder_node_list) + [dim_x]
    params = {}
    keys = jax.random.split(key, 2 * (len(sizes) - 1))
    for li in range(len(sizes) - 1):
        fan_in, fan_out = sizes[li], sizes[li + 1]
        bound = 1.0 / jnp.sqrt(jnp.float32(fan_in))
        w = jax.random.uniform(keys[2 * li], (fan_in, fan_out),
                               jnp.float32, -bound, bound)
        b = jax.random.uniform(keys[2 * li + 1], (1, fan_out),
                               jnp.float32, -bound, bound)
        params[f"w{li + 1}"] = w
        params[f"b{li + 1}"] = b
    return params


def decoder_ref(z, params):
    """Pure-JAX reference for correctness checking."""
    h = z @ params["w1"] + params["b1"]
    h = jnp.where(h > 0, h, 0.2 * h)
    h = h @ params["w2"] + params["b2"]
    h = jnp.where(h > 0, h, 0.2 * h)
    return h @ params["w3"] + params["b3"]


if __name__ == "__main__":
    # Shapes consistent with Decoder(dim_z=16, dim_x=120, decoder_node_list=[64, 64],
    # final_activation=None).
    dim_z = 16
    decoder_node_list = [64, 64]
    dim_x = 120

    key = jax.random.PRNGKey(0)
    k_params, k_z = jax.random.split(key)
    params = init_decoder_params(k_params, dim_z, decoder_node_list, dim_x)

    # --- f32 path, batch multiple of 8 (exact parity with the PyTorch module) ---
    batch = 8
    z = jax.random.normal(k_z, (batch, dim_z), dtype=jnp.float32)
    ref = decoder_ref(z, params)
    out = jax.block_until_ready(decoder_forward(z, params))
    assert out.shape == (batch, dim_x)
    assert jnp.allclose(out, ref, atol=1e-5, rtol=1e-5), "f32 mismatch vs reference"

    # --- ragged batch (exercises the cdiv grid / masked partial last block) ---
    batch_r = 13
    z_r = jax.random.normal(jax.random.PRNGKey(1), (batch_r, dim_z), dtype=jnp.float32)
    ref_r = decoder_ref(z_r, params)
    out_r = jax.block_until_ready(decoder_forward(z_r, params, tile_b=8))
    assert out_r.shape == (batch_r, dim_x)
    assert jnp.allclose(out_r, ref_r, atol=1e-5, rtol=1e-5), "ragged-batch mismatch"

    # --- bf16 I/O path (cast z upstream, bf16 weights, f32 accumulation) ---
    out_bf16 = decoder_forward(z.astype(jnp.bfloat16), params,
                               compute_dtype=jnp.bfloat16)
    out_bf16 = jax.block_until_ready(out_bf16)
    assert out_bf16.shape == (batch, dim_x)
    assert jnp.allclose(out_bf16.astype(jnp.float32), ref,
                        atol=1e-1, rtol=1e-1), "bf16 mismatch vs reference"

    print("KERNEL_OK")
</pallas_src>

<mosaic_0001>
module attributes {stable_mosaic.version = 11 : i64} {
  func.func @_decoder_kernel(%arg0: i32, %arg1: memref<8x16xf32, #tpu.memory_space<vmem>>, %arg2: memref<16x64xf32, #tpu.memory_space<vmem>>, %arg3: memref<1x64xf32, #tpu.memory_space<vmem>>, %arg4: memref<64x64xf32, #tpu.memory_space<vmem>>, %arg5: memref<1x64xf32, #tpu.memory_space<vmem>>, %arg6: memref<64x120xf32, #tpu.memory_space<vmem>>, %arg7: memref<1x120xf32, #tpu.memory_space<vmem>>, %arg8: memref<8x120xf32, #tpu.memory_space<vmem>>) attributes {dimension_semantics = [#tpu.dimension_semantics<parallel>], iteration_bounds = array<i64: 1>, scalar_prefetch = 0 : i64, scratch_operands = 0 : i64, tpu.core_type = #tpu.core_type<tc>, window_params = [{transform_indices = @transform_0, window_bounds = array<i64: 8, 16>}, {pipeline_mode = #tpu.pipeline_mode<synchronous>, transform_indices = @transform_1, window_bounds = array<i64: 16, 64>}, {pipeline_mode = #tpu.pipeline_mode<synchronous>, transform_indices = @transform_2, window_bounds = array<i64: 1, 64>}, {pipeline_mode = #tpu.pipeline_mode<synchronous>, transform_indices = @transform_3, window_bounds = array<i64: 64, 64>}, {pipeline_mode = #tpu.pipeline_mode<synchronous>, transform_indices = @transform_4, window_bounds = array<i64: 1, 64>}, {pipeline_mode = #tpu.pipeline_mode<synchronous>, transform_indices = @transform_5, window_bounds = array<i64: 64, 120>}, {pipeline_mode = #tpu.pipeline_mode<synchronous>, transform_indices = @transform_6, window_bounds = array<i64: 1, 120>}, {transform_indices = @transform_7, window_bounds = array<i64: 8, 120>}]} {
    %c0 = arith.constant 0 : index
    %c0_0 = arith.constant 0 : index
    %0 = vector.load %arg1[%c0, %c0_0] : memref<8x16xf32, #tpu.memory_space<vmem>>, vector<8x16xf32>
    %c0_1 = arith.constant 0 : index
    %c0_2 = arith.constant 0 : index
    %1 = vector.load %arg2[%c0_1, %c0_2] : memref<16x64xf32, #tpu.memory_space<vmem>>, vector<16x64xf32>
    %cst = arith.constant dense<0.000000e+00> : vector<8x64xf32>
    %2 = tpu.matmul %0, %1, %cst {dimension_numbers = #tpu.dot_dimension_numbers<[1], [0], [0], [1], [0, 0, 1, 1], [], []>} : vector<8x16xf32>, vector<16x64xf32>, vector<8x64xf32> -> vector<8x64xf32>
    %c0_3 = arith.constant 0 : index
    %c0_4 = arith.constant 0 : index
    %3 = vector.load %arg3[%c0_3, %c0_4] : memref<1x64xf32, #tpu.memory_space<vmem>>, vector<1x64xf32>
    %4 = vector.broadcast %3 : vector<1x64xf32> to vector<8x64xf32>
    %5 = arith.addf %2, %4 : vector<8x64xf32>
    %cst_5 = arith.constant 0.000000e+00 : f32
    %6 = vector.broadcast %cst_5 : f32 to vector<8x64xf32>
    %7 = arith.cmpf ogt, %5, %6 : vector<8x64xf32>
    %cst_6 = arith.constant 2.000000e-01 : f32
    %8 = vector.broadcast %cst_6 : f32 to vector<8x64xf32>
    %9 = arith.mulf %8, %5 : vector<8x64xf32>
    %10 = arith.select %7, %5, %9 : vector<8x64xi1>, vector<8x64xf32>
    %c0_7 = arith.constant 0 : index
    %c0_8 = arith.constant 0 : index
    %11 = vector.load %arg4[%c0_7, %c0_8] : memref<64x64xf32, #tpu.memory_space<vmem>>, vector<64x64xf32>
    %cst_9 = arith.constant dense<0.000000e+00> : vector<8x64xf32>
    %12 = tpu.matmul %10, %11, %cst_9 {dimension_numbers = #tpu.dot_dimension_numbers<[1], [0], [0], [1], [0, 0, 1, 1], [], []>} : vector<8x64xf32>, vector<64x64xf32>, vector<8x64xf32> -> vector<8x64xf32>
    %c0_10 = arith.constant 0 : index
    %c0_11 = arith.constant 0 : index
    %13 = vector.load %arg5[%c0_10, %c0_11] : memref<1x64xf32, #tpu.memory_space<vmem>>, vector<1x64xf32>
    %14 = vector.broadcast %13 : vector<1x64xf32> to vector<8x64xf32>
    %15 = arith.addf %12, %14 : vector<8x64xf32>
    %cst_12 = arith.constant 0.000000e+00 : f32
    %16 = vector.broadcast %cst_12 : f32 to vector<8x64xf32>
    %17 = arith.cmpf ogt, %15, %16 : vector<8x64xf32>
    %cst_13 = arith.constant 2.000000e-01 : f32
    %18 = vector.broadcast %cst_13 : f32 to vector<8x64xf32>
    %19 = arith.mulf %18, %15 : vector<8x64xf32>
    %20 = arith.select %17, %15, %19 : vector<8x64xi1>, vector<8x64xf32>
    %c0_14 = arith.constant 0 : index
    %c0_15 = arith.constant 0 : index
    %21 = vector.load %arg6[%c0_14, %c0_15] : memref<64x120xf32, #tpu.memory_space<vmem>>, vector<64x120xf32>
    %cst_16 = arith.constant dense<0.000000e+00> : vector<8x120xf32>
    %22 = tpu.matmul %20, %21, %cst_16 {dimension_numbers = #tpu.dot_dimension_numbers<[1], [0], [0], [1], [0, 0, 1, 1], [], []>} : vector<8x64xf32>, vector<64x120xf32>, vector<8x120xf32> -> vector<8x120xf32>
    %c0_17 = arith.constant 0 : index
    %c0_18 = arith.constant 0 : index
    %23 = vector.load %arg7[%c0_17, %c0_18] : memref<1x120xf32, #tpu.memory_space<vmem>>, vector<1x120xf32>
    %24 = vector.broadcast %23 : vector<1x120xf32> to vector<8x120xf32>
    %25 = arith.addf %22, %24 : vector<8x120xf32>
    %c0_19 = arith.constant 0 : index
    %c0_20 = arith.constant 0 : index
    %26 = vector.load %arg8[%c0_19, %c0_20] : memref<8x120xf32, #tpu.memory_space<vmem>>, vector<8x120xf32>
    tpu.vector_store %arg8[%c0_19, %c0_20], %25 {strides = array<i32>} : memref<8x120xf32, #tpu.memory_space<vmem>>, vector<8x120xf32>,
    return
  }
  func.func @transform_0(%arg0: i32) -> (i32, i32) {
    %c0_i32 = arith.constant 0 : i32
    %c0_i32_0 = arith.constant 0 : i32
    return %arg0, %c0_i32 : i32, i32
  }
  func.func @transform_1(%arg0: i32) -> (i32, i32) {
    %c0_i32 = arith.constant 0 : i32
    %c0_i32_0 = arith.constant 0 : i32
    %c0_i32_1 = arith.constant 0 : i32
    return %c0_i32, %c0_i32_0 : i32, i32
  }
  func.func @transform_2(%arg0: i32) -> (i32, i32) {
    %c0_i32 = arith.constant 0 : i32
    %c0_i32_0 = arith.constant 0 : i32
    %c0_i32_1 = arith.constant 0 : i32
    return %c0_i32, %c0_i32_0 : i32, i32
  }
  func.func @transform_3(%arg0: i32) -> (i32, i32) {
    %c0_i32 = arith.constant 0 : i32
    %c0_i32_0 = arith.constant 0 : i32
    %c0_i32_1 = arith.constant 0 : i32
    return %c0_i32, %c0_i32_0 : i32, i32
  }
  func.func @transform_4(%arg0: i32) -> (i32, i32) {
    %c0_i32 = arith.constant 0 : i32
    %c0_i32_0 = arith.constant 0 : i32
    %c0_i32_1 = arith.constant 0 : i32
    return %c0_i32, %c0_i32_0 : i32, i32
  }
  func.func @transform_5(%arg0: i32) -> (i32, i32) {
    %c0_i32 = arith.constant 0 : i32
    %c0_i32_0 = arith.constant 0 : i32
    %c0_i32_1 = arith.constant 0 : i32
    return %c0_i32, %c0_i32_0 : i32, i32
  }
  func.func @transform_6(%arg0: i32) -> (i32, i32) {
    %c0_i32 = arith.constant 0 : i32
    %c0_i32_0 = arith.constant 0 : i32
    %c0_i32_1 = arith.constant 0 : i32
    return %c0_i32, %c0_i32_0 : i32, i32
  }
  func.func @transform_7(%arg0: i32) -> (i32, i32) {
    %c0_i32 = arith.constant 0 : i32
    %c0_i32_0 = arith.constant 0 : i32
    return %arg0, %c0_i32 : i32, i32
  }
}

</mosaic_0001>

<llo_original>
// kernel: tpu_custom_call.1
$region0: #{tpu_custom_call.1}
  #allocation0 [shape = 'u32[]', space=smem, size = 0x4, offset = 0x4, fixed_abs, tag = 'smem constant byte address 0x4 - core index']
  #allocation1 [shape = 'u32[144,128]{1,0:T(1,128)}', space=vmem, size = 0x12000, scoped, tag = 'internal scratch']
  %s0 = inlined_call_operand.hbm [shape: f32[8,16], index: 0, kind: input, shape index: {}]
  %s1 = inlined_call_operand.hbm [shape: f32[16,64], index: 1, kind: input, shape index: {}]
  %s2 = inlined_call_operand.vmem [shape: f32[1,64], index: 2, kind: input, shape index: {}]
  %s3 = inlined_call_operand.hbm [shape: f32[64,64], index: 3, kind: input, shape index: {}]
  %s4 = inlined_call_operand.vmem [shape: f32[1,64], index: 4, kind: input, shape index: {}]
  %s5 = inlined_call_operand.hbm [shape: f32[64,120], index: 5, kind: input, shape index: {}]
  %s6 = inlined_call_operand.vmem [shape: f32[1,120], index: 6, kind: input, shape index: {}]
  %s7 = inlined_call_operand.hbm [shape: f32[8,120], index: 7, kind: output, shape index: {}]
  %s8 = sld [smem:[#allocation0]]
  $region54: #{tpu_custom_call.1} parent=0
    _
  %s10 = ssub.s32 1, %s8
  %s11 = scalar_select 0, %s10, %s8
  $region1: #{tpu_custom_call.1} parent=0
    #allocation2 [shape = 'u8[4096]{0}', space=vmem, size = 0x1000, scoped, tag = 'input window, operand 0, single buffered']
    #allocation3 [shape = 's32[1]{0}', space=sflag, size = 0x4, scoped, tag = 'scoped memory for tpu_custom_call.1']
    #allocation4 [shape = 's32[1]{0}', space=sflag, size = 0x4, scoped, tag = 'scoped memory for tpu_custom_call.1']
    #allocation5 [shape = 'u8[8192]{0}', space=vmem, size = 0x2000, scoped, tag = 'input window, operand 1, single buffered']
    #allocation6 [shape = 's32[1]{0}', space=sflag, size = 0x4, scoped, tag = 'scoped memory for tpu_custom_call.1']
    #allocation7 [shape = 'u8[32768]{0}', space=vmem, size = 0x8000, scoped, tag = 'input window, operand 3, single buffered']
    #allocation8 [shape = 'u8[32768]{0}', space=vmem, size = 0x8000, scoped, tag = 'input window, operand 5, single buffered']
    #allocation9 [shape = 's32[1]{0}', space=sflag, size = 0x4, scoped, tag = 'scoped memory for tpu_custom_call.1']
    #allocation10 [shape = 'u8[4096]{0}', space=vmem, size = 0x1000, scoped, tag = 'output window, operand 0, single buffered']
    %12 = vsyncpa [#allocation3], 0
    %13 = vsyncpa [#allocation6], 0
    %14 = vsyncpa [#allocation9], 0
    %15 = vsyncpa [#allocation4], 0
    // Predicated region
    $region2: #{tpu_custom_call.1} parent=1 // pred_check
      _
    $region3: #{tpu_custom_call.1} parent=1 // pred_check_branch
      %17 = sbr.rel (0) target = $region5
    $region4: #{tpu_custom_call.1} parent=1 // pred_region
      %s19 = ssub.s32 128, 128
      %20 = vsyncadd [#allocation3], %s19
      %s22 = sshll.u32 [#allocation2], 4
      %s23 = int_to_ptr.vmem [resolvable:$true] %s22
      %25 = dma.hbm_to_vmem [thread:$0]  %s0, 128, %s23, [#allocation3]
    $region5: #{tpu_custom_call.1} parent=1 // pred_fallthru
      _
    // Predicated region
    $region6: #{tpu_custom_call.1} parent=1 // pred_check
      _
    $region7: #{tpu_custom_call.1} parent=1 // pred_check_branch
      %27 = sbr.rel (0) target = $region9
    $region8: #{tpu_custom_call.1} parent=1 // pred_region
      %s29 = ssub.s32 256, 256
      %30 = vsyncadd [#allocation6], %s29
      %s31 = sshll.u32 [#allocation5], 4
      %s32 = int_to_ptr.vmem [resolvable:$true] %s31
      %37 = dma.hbm_to_vmem [thread:$0]  %s1, 256, %s32, [#allocation6], 128, 128, 8
    $region9: #{tpu_custom_call.1} parent=1 // pred_fallthru
      _
    // Predicated region
    $region10: #{tpu_custom_call.1} parent=1 // pred_check
      _
    $region11: #{tpu_custom_call.1} parent=1 // pred_check_branch
      %39 = sbr.rel (0) target = $region13
    $region12: #{tpu_custom_call.1} parent=1 // pred_region
      _
    $region13: #{tpu_custom_call.1} parent=1 // pred_fallthru
      _
    // Predicated region
    $region14: #{tpu_custom_call.1} parent=1 // pred_check
      _
    $region15: #{tpu_custom_call.1} parent=1 // pred_check_branch
      %41 = sbr.rel (0) target = $region17
    $region16: #{tpu_custom_call.1} parent=1 // pred_region
      %s43 = ssub.s32 1024, 1024
      %44 = vsyncadd [#allocation6], %s43
      %s45 = sshll.u32 [#allocation7], 4
      %s46 = int_to_ptr.vmem [resolvable:$true] %s45
      %51 = dma.hbm_to_vmem [thread:$0]  %s3, 1024, %s46, [#allocation6], 128, 128, 8
    $region17: #{tpu_custom_call.1} parent=1 // pred_fallthru
      _
    // Predicated region
    $region18: #{tpu_custom_call.1} parent=1 // pred_check
      _
    $region19: #{tpu_custom_call.1} parent=1 // pred_check_branch
      %53 = sbr.rel (0) target = $region21
    $region20: #{tpu_custom_call.1} parent=1 // pred_region
      _
    $region21: #{tpu_custom_call.1} parent=1 // pred_fallthru
      _
    // Predicated region
    $region22: #{tpu_custom_call.1} parent=1 // pred_check
      _
    $region23: #{tpu_custom_call.1} parent=1 // pred_check_branch
      %55 = sbr.rel (0) target = $region25
    $region24: #{tpu_custom_call.1} parent=1 // pred_region
      %s57 = ssub.s32 1024, 1024
      %58 = vsyncadd [#allocation9], %s57
      %s59 = sshll.u32 [#allocation8], 4
      %s60 = int_to_ptr.vmem [resolvable:$true] %s59
      %65 = dma.hbm_to_vmem [thread:$0]  %s5, 1024, %s60, [#allocation9], 128, 128, 8
    $region25: #{tpu_custom_call.1} parent=1 // pred_fallthru
      _
    // Predicated region
    $region26: #{tpu_custom_call.1} parent=1 // pred_check
      _
    $region27: #{tpu_custom_call.1} parent=1 // pred_check_branch
      %67 = sbr.rel (0) target = $region29
    $region28: #{tpu_custom_call.1} parent=1 // pred_region
      _
    $region29: #{tpu_custom_call.1} parent=1 // pred_fallthru
      _
    // Predicated region
    $region30: #{tpu_custom_call.1} parent=1 // pred_check
      _
    $region31: #{tpu_custom_call.1} parent=1 // pred_check_branch
      %69 = sbr.rel (0) target = $region33
    $region32: #{tpu_custom_call.1} parent=1 // pred_region
      %70 = dma.done [#allocation3], 128
    $region33: #{tpu_custom_call.1} parent=1 // pred_fallthru
      _
    // Predicated region
    $region34: #{tpu_custom_call.1} parent=1 // pred_check
      _
    $region35: #{tpu_custom_call.1} parent=1 // pred_check_branch
      %72 = sbr.rel (0) target = $region37
    $region36: #{tpu_custom_call.1} parent=1 // pred_region
      %73 = dma.done [#allocation6], 256
    $region37: #{tpu_custom_call.1} parent=1 // pred_fallthru
      _
    // Predicated region
    $region38: #{tpu_custom_call.1} parent=1 // pred_check
      _
    $region39: #{tpu_custom_call.1} parent=1 // pred_check_branch
      %75 = sbr.rel (0) target = $region41
    $region40: #{tpu_custom_call.1} parent=1 // pred_region
      %76 = dma.done [#allocation6], 1024
    $region41: #{tpu_custom_call.1} parent=1 // pred_fallthru
      _
    // Predicated region
    $region42: #{tpu_custom_call.1} parent=1 // pred_check
      _
    $region43: #{tpu_custom_call.1} parent=1 // pred_check_branch
      %78 = sbr.rel (0) target = $region45
    $region44: #{tpu_custom_call.1} parent=1 // pred_region
      %79 = dma.done [#allocation9], 1024
    $region45: #{tpu_custom_call.1} parent=1 // pred_fallthru
      _
    %v80 = vld [vmem:[#allocation2] sm:$0xff]
    %v81 = vld [vmem:[#allocation5] sm:$0xff]
    %v82 = vld [vmem:[#allocation5 + $0x8] sm:$0xff]
    %v83 = vld [vmem:[%s2] sm:$0x1]
    %v85 = vlaneseq
    %v86 = vshrl.u32 %v85, 7
    %v87 = vsub.s32 0, %v86
    %v88 = vrot.slane %v83, %v87
    %vm90 = vcmask 130048
    %v92 = vsel %vm90, %v80, 0
    %94 = vmatprep.subr.mxu0 0.0
    %95 = vmatpush1.msra.mxu0 %v81
    %96 = vmatprep.subr.mxu0 0.0
    %97 = vmatpush1.msra.mxu0 %v82
    %98 = vmatprep.subr.mxu0 0.0
    %99 = vmatpush1.msra.mxu0 0.0
    %100 = vmatprep.subr.mxu0 0.0
    %101 = vmatpush1.msra.mxu0 0.0
    %102 = vmatprep.subr.mxu0 0.0
    %103 = vmatpush1.msra.mxu0 0.0
    %104 = vmatprep.subr.mxu0 0.0
    %105 = vmatpush1.msra.mxu0 0.0
    %106 = vmatprep.subr.mxu0 0.0
    %107 = vmatpush1.msra.mxu0 0.0
    %108 = vmatprep.subr.mxu0 0.0
    %109 = vmatpush1.msra.mxu0 0.0
    %110 = vmatprep.subr.mxu0 0.0
    %111 = vmatpush1.msra.mxu0 0.0
    %112 = vmatprep.subr.mxu0 0.0
    %113 = vmatpush1.msra.mxu0 0.0
    %114 = vmatprep.subr.mxu0 0.0
    %115 = vmatpush1.msra.mxu0 0.0
    %116 = vmatprep.subr.mxu0 0.0
    %117 = vmatpush1.msra.mxu0 0.0
    %118 = vmatprep.subr.mxu0 0.0
    %119 = vmatpush1.msra.mxu0 0.0
    %120 = vmatprep.subr.mxu0 0.0
    %121 = vmatpush1.msra.mxu0 0.0
    %122 = vmatprep.subr.mxu0 0.0
    %123 = vmatpush1.msra.mxu0 0.0
    %124 = vmatprep.subr.mxu0 0.0
    %125 = vmatpush1.msra.mxu0 0.0
    %126 = vmatprep.subr.mxu0 0.0
    %127 = vmatpush1.msra.mxu0 0.0
    %128 = vmatprep.subr.mxu0 0.0
    %129 = vmatpush1.msra.mxu0 0.0
    %130 = vmatprep.subr.mxu0 0.0
    %131 = vmatpush1.msra.mxu0 0.0
    %132 = vmatprep.subr.mxu0 0.0
    %133 = vmatpush1.msra.mxu0 0.0
    %134 = vmatprep.subr.mxu0 0.0
    %135 = vmatpush1.msra.mxu0 0.0
    %136 = vmatprep.subr.mxu0 0.0
    %137 = vmatpush1.msra.mxu0 0.0
    %138 = vmatprep.subr.mxu0 0.0
    %139 = vmatpush1.msra.mxu0 0.0
    %140 = vmatprep.subr.mxu0 0.0
    %141 = vmatpush1.msra.mxu0 0.0
    %142 = vmatprep.subr.mxu0 0.0
    %143 = vmatpush1.msra.mxu0 0.0
    %144 = vmatprep.subr.mxu0 0.0
    %145 = vmatpush1.msra.mxu0 0.0
    %146 = vmatprep.subr.mxu0 0.0
    %147 = vmatpush1.msra.mxu0 0.0
    %148 = vmatprep.subr.mxu0 0.0
    %149 = vmatpush1.msra.mxu0 0.0
    %150 = vmatprep.subr.mxu0 0.0
    %151 = vmatpush1.msra.mxu0 0.0
    %152 = vmatprep.subr.mxu0 0.0
    %153 = vmatpush1.msra.mxu0 0.0
    %154 = vmatprep.subr.mxu0 0.0
    %155 = vmatpush1.msra.mxu0 0.0
    %156 = vmatprep.subr.mxu0 0.0
    %157 = vmatpush1.msra.mxu0 0.0
    %158 = vmatprep.mubr.f32.mxu0 0.0
    %159 = vmatmul.mubr.f32.gmra.mrb[0].mxu0 %v92
    %v160 = vpop.f32.mrb[0].mxu0
    %v161 = vadd.f32 %v88, %v160
    %v162 = vpop.f32.mrb[0].mxu0
    %163 = vdwg.mxu0
    %vm164 = vcmp.gt.f32.partialorder %v161, 0.0
    %v165 = vmul.f32 %v161, 0.2
    %v166 = vsel %vm164, %v161, %v165
    %v167 = vld [vmem:[#allocation7] sm:$0xff]
    %v168 = vld [vmem:[#allocation7 + $0x8] sm:$0xff]
    %v169 = vld [vmem:[#allocation7 + $0x10] sm:$0xff]
    %v170 = vld [vmem:[#allocation7 + $0x18] sm:$0xff]
    %v171 = vld [vmem:[#allocation7 + $0x20] sm:$0xff]
    %v172 = vld [vmem:[#allocation7 + $0x28] sm:$0xff]
    %v173 = vld [vmem:[#allocation7 + $0x30] sm:$0xff]
    %v174 = vld [vmem:[#allocation7 + $0x38] sm:$0xff]
    %v175 = vld [vmem:[%s4] sm:$0x1]
    %v177 = vlaneseq
    %v178 = vshrl.u32 %v177, 7
    %v179 = vsub.s32 0, %v178
    %v180 = vrot.slane %v175, %v179
    %vm182 = vcmask 523264
    %v184 = vsel %vm182, %v166, 0
    %186 = vmatprep.subr.mxu0 0.0
    %187 = vmatpush1.msra.mxu0 %v167
    %188 = vmatprep.subr.mxu0 0.0
    %189 = vmatpush1.msra.mxu0 %v168
    %190 = vmatprep.subr.mxu0 0.0
    %191 = vmatpush1.msra.mxu0 %v169
    %192 = vmatprep.subr.mxu0 0.0
    %193 = vmatpush1.msra.mxu0 %v170
    %194 = vmatprep.subr.mxu0 0.0
    %195 = vmatpush1.msra.mxu0 %v171
    %196 = vmatprep.subr.mxu0 0.0
    %197 = vmatpush1.msra.mxu0 %v172
    %198 = vmatprep.subr.mxu0 0.0
    %199 = vmatpush1.msra.mxu0 %v173
    %200 = vmatprep.subr.mxu0 0.0
    %201 = vmatpush1.msra.mxu0 %v174
    %202 = vmatprep.subr.mxu0 0.0
    %203 = vmatpush1.msra.mxu0 0.0
    %204 = vmatprep.subr.mxu0 0.0
    %205 = vmatpush1.msra.mxu0 0.0
    %206 = vmatprep.subr.mxu0 0.0
    %207 = vmatpush1.msra.mxu0 0.0
    %208 = vmatprep.subr.mxu0 0.0
    %209 = vmatpush1.msra.mxu0 0.0
    %210 = vmatprep.subr.mxu0 0.0
    %211 = vmatpush1.msra.mxu0 0.0
    %212 = vmatprep.subr.mxu0 0.0
    %213 = vmatpush1.msra.mxu0 0.0
    %214 = vmatprep.subr.mxu0 0.0
    %215 = vmatpush1.msra.mxu0 0.0
    %216 = vmatprep.subr.mxu0 0.0
    %217 = vmatpush1.msra.mxu0 0.0
    %218 = vmatprep.subr.mxu0 0.0
    %219 = vmatpush1.msra.mxu0 0.0
    %220 = vmatprep.subr.mxu0 0.0
    %221 = vmatpush1.msra.mxu0 0.0
    %222 = vmatprep.subr.mxu0 0.0
    %223 = vmatpush1.msra.mxu0 0.0
    %224 = vmatprep.subr.mxu0 0.0
    %225 = vmatpush1.msra.mxu0 0.0
    %226 = vmatprep.subr.mxu0 0.0
    %227 = vmatpush1.msra.mxu0 0.0
    %228 = vmatprep.subr.mxu0 0.0
    %229 = vmatpush1.msra.mxu0 0.0
    %230 = vmatprep.subr.mxu0 0.0
    %231 = vmatpush1.msra.mxu0 0.0
    %232 = vmatprep.subr.mxu0 0.0
    %233 = vmatpush1.msra.mxu0 0.0
    %234 = vmatprep.subr.mxu0 0.0
    %235 = vmatpush1.msra.mxu0 0.0
    %236 = vmatprep.subr.mxu0 0.0
    %237 = vmatpush1.msra.mxu0 0.0
    %238 = vmatprep.subr.mxu0 0.0
    %239 = vmatpush1.msra.mxu0 0.0
    %240 = vmatprep.subr.mxu0 0.0
    %241 = vmatpush1.msra.mxu0 0.0
    %242 = vmatprep.subr.mxu0 0.0
    %243 = vmatpush1.msra.mxu0 0.0
    %244 = vmatprep.subr.mxu0 0.0
    %245 = vmatpush1.msra.mxu0 0.0
    %246 = vmatprep.subr.mxu0 0.0
    %247 = vmatpush1.msra.mxu0 0.0
    %248 = vmatprep.subr.mxu0 0.0
    %249 = vmatpush1.msra.mxu0 0.0
    %250 = vmatprep.mubr.f32.mxu0 0.0
    %251 = vmatmul.mubr.f32.gmra.mrb[0].mxu0 %v184
    %v252 = vpop.f32.mrb[0].mxu0
    %v253 = vadd.f32 %v180, %v252
    %v254 = vpop.f32.mrb[0].mxu0
    %255 = vdwg.mxu0
    %vm256 = vcmp.gt.f32.partialorder %v253, 0.0
    %v257 = vmul.f32 %v253, 0.2
    %v258 = vsel %vm256, %v253, %v257
    %v259 = vld [vmem:[#allocation8] sm:$0xff]
    %v260 = vld [vmem:[#allocation8 + $0x8] sm:$0xff]
    %v261 = vld [vmem:[#allocation8 + $0x10] sm:$0xff]
    %v262 = vld [vmem:[#allocation8 + $0x18] sm:$0xff]
    %v263 = vld [vmem:[#allocation8 + $0x20] sm:$0xff]
    %v264 = vld [vmem:[#allocation8 + $0x28] sm:$0xff]
    %v265 = vld [vmem:[#allocation8 + $0x30] sm:$0xff]
    %v266 = vld [vmem:[#allocation8 + $0x38] sm:$0xff]
    %v267 = vld [vmem:[%s6] sm:$0x1]
    %v269 = vlaneseq
    %v270 = vshrl.u32 %v269, 7
    %v271 = vsub.s32 0, %v270
    %v272 = vrot.slane %v267, %v271
    %v275 = vsel %vm182, %v258, 0
    %277 = vmatprep.subr.mxu0 0.0
    %278 = vmatpush1.msra.mxu0 %v259
    %279 = vmatprep.subr.mxu0 0.0
    %280 = vmatpush1.msra.mxu0 %v260
    %281 = vmatprep.subr.mxu0 0.0
    %282 = vmatpush1.msra.mxu0 %v261
    %283 = vmatprep.subr.mxu0 0.0
    %284 = vmatpush1.msra.mxu0 %v262
    %285 = vmatprep.subr.mxu0 0.0
    %286 = vmatpush1.msra.mxu0 %v263
    %287 = vmatprep.subr.mxu0 0.0
    %288 = vmatpush1.msra.mxu0 %v264
    %289 = vmatprep.subr.mxu0 0.0
    %290 = vmatpush1.msra.mxu0 %v265
    %291 = vmatprep.subr.mxu0 0.0
    %292 = vmatpush1.msra.mxu0 %v266
    %293 = vmatprep.subr.mxu0 0.0
    %294 = vmatpush1.msra.mxu0 0.0
    %295 = vmatprep.subr.mxu0 0.0
    %296 = vmatpush1.msra.mxu0 0.0
    %297 = vmatprep.subr.mxu0 0.0
    %298 = vmatpush1.msra.mxu0 0.0
    %299 = vmatprep.subr.mxu0 0.0
    %300 = vmatpush1.msra.mxu0 0.0
    %301 = vmatprep.subr.mxu0 0.0
    %302 = vmatpush1.msra.mxu0 0.0
    %303 = vmatprep.subr.mxu0 0.0
    %304 = vmatpush1.msra.mxu0 0.0
    %305 = vmatprep.subr.mxu0 0.0
    %306 = vmatpush1.msra.mxu0 0.0
    %307 = vmatprep.subr.mxu0 0.0
    %308 = vmatpush1.msra.mxu0 0.0
    %309 = vmatprep.subr.mxu0 0.0
    %310 = vmatpush1.msra.mxu0 0.0
    %311 = vmatprep.subr.mxu0 0.0
    %312 = vmatpush1.msra.mxu0 0.0
    %313 = vmatprep.subr.mxu0 0.0
    %314 = vmatpush1.msra.mxu0 0.0
    %315 = vmatprep.subr.mxu0 0.0
    %316 = vmatpush1.msra.mxu0 0.0
    %317 = vmatprep.subr.mxu0 0.0
    %318 = vmatpush1.msra.mxu0 0.0
    %319 = vmatprep.subr.mxu0 0.0
    %320 = vmatpush1.msra.mxu0 0.0
    %321 = vmatprep.subr.mxu0 0.0
    %322 = vmatpush1.msra.mxu0 0.0
    %323 = vmatprep.subr.mxu0 0.0
    %324 = vmatpush1.msra.mxu0 0.0
    %325 = vmatprep.subr.mxu0 0.0
    %326 = vmatpush1.msra.mxu0 0.0
    %327 = vmatprep.subr.mxu0 0.0
    %328 = vmatpush1.msra.mxu0 0.0
    %329 = vmatprep.subr.mxu0 0.0
    %330 = vmatpush1.msra.mxu0 0.0
    %331 = vmatprep.subr.mxu0 0.0
    %332 = vmatpush1.msra.mxu0 0.0
    %333 = vmatprep.subr.mxu0 0.0
    %334 = vmatpush1.msra.mxu0 0.0
    %335 = vmatprep.subr.mxu0 0.0
    %336 = vmatpush1.msra.mxu0 0.0
    %337 = vmatprep.subr.mxu0 0.0
    %338 = vmatpush1.msra.mxu0 0.0
    %339 = vmatprep.subr.mxu0 0.0
    %340 = vmatpush1.msra.mxu0 0.0
    %341 = vmatprep.mubr.f32.mxu0 0.0
    %342 = vmatmul.mubr.f32.gmra.mrb[0].mxu0 %v275
    %v343 = vpop.f32.mrb[0].mxu0
    %v344 = vadd.f32 %v272, %v343
    %v345 = vpop.f32.mrb[0].mxu0
    %346 = vdwg.mxu0
    %vm347 = vcmask 982016
    %348 = vst.msk [vmem:[#allocation10] sm:$0xff] %vm347, %v344
    // Predicated region
    $region46: #{tpu_custom_call.1} parent=1 // pred_check
      _
    $region47: #{tpu_custom_call.1} parent=1 // pred_check_branch
      %350 = sbr.rel (0) target = $region49
    $region48: #{tpu_custom_call.1} parent=1 // pred_region
      %s352 = ssub.s32 128, 128
      %353 = vsyncadd [#allocation4], %s352
      %s355 = sshll.u32 [#allocation10], 4
      %s356 = int_to_ptr.vmem [resolvable:$true] %s355
      %358 = dma.vmem_to_hbm [thread:$0]  %s356, 128, %s7, [#allocation4]
    $region49: #{tpu_custom_call.1} parent=1 // pred_fallthru
      _
    // Predicated region
    $region50: #{tpu_custom_call.1} parent=1 // pred_check
      _
    $region51: #{tpu_custom_call.1} parent=1 // pred_check_branch
      %360 = sbr.rel (0) target = $region53
    $region52: #{tpu_custom_call.1} parent=1 // pred_region
      %361 = dma.done [#allocation4], 128
    $region53: #{tpu_custom_call.1} parent=1 // pred_fallthru
      _
    %362 = vsyncpa [#allocation3], 1
    %363 = vsyncpa [#allocation6], 1
    %364 = vsyncpa [#allocation9], 1
    %365 = vsyncpa [#allocation4], 1

</llo_original>
